<compile_context>
chip_gen: v7x
topology: tpu7x:2x2x1
jax: 0.10.0
libtpu: 0.0.40
codegen_flags: <defaults>
</compile_context>

<pallas_src>
import functools

import jax
import jax.numpy as jnp
from jax import lax
from jax.experimental import pallas as pl
from jax.experimental.pallas import tpu as pltpu


def _policy_kernel(n_logits, x_ref, we_ref, be_ref, wh_ref, bh_ref, out_ref):
    """One batch tile: encoder + fused (logits | value) heads.

    x_ref  : [TB, D]  bf16   (pipelined per grid step)
    we_ref : [D, H]   bf16   (VMEM-resident)
    be_ref : [1, H]   f32    (VMEM-resident)
    wh_ref : [H, NP]  bf16   (VMEM-resident; cols [0:N)=Wl, col N=Wv, rest 0)
    bh_ref : [1, NP]  f32    (VMEM-resident; same column layout)
    out_ref: [TB, NP] f32    (lane-dense output slab)
    """
    # Encoder (hidden layers): h = relu(x @ We + be). bf16 matmul, f32 accumulate,
    # bias add + ReLU in f32.
    h = jnp.dot(x_ref[...], we_ref[...], preferred_element_type=jnp.float32)
    h = jnp.maximum(h + be_ref[...], 0.0)

    # Fused heads: [logits | value | pad] = h @ W_heads + b_heads.
    heads = jnp.dot(h.astype(wh_ref.dtype), wh_ref[...],
                    preferred_element_type=jnp.float32) + bh_ref[...]

    # tanh(.) * 10 on the logit columns (EUP); identity on the value column / pad.
    col = lax.broadcasted_iota(jnp.int32, heads.shape, 1)
    out_ref[...] = jnp.where(col < n_logits, jnp.tanh(heads) * 10.0, heads)


def base_policy_forward(obs, params, *, max_batch_tile=512):
    """obs: [B, ...]. Returns (logits [B, num_outputs], value [B])."""
    B = obs.shape[0]
    x = obs.reshape(B, -1).astype(jnp.bfloat16)

    we = params["we"].astype(jnp.bfloat16)   # [D, H]
    be = params["be"].astype(jnp.float32)    # [1, H]
    wl = params["wl"]                        # [H, N]
    bl = params["bl"]                        # [1, N]
    wv = params["wv"]                        # [1, H]  (row vector)
    bv = params["bv"]                        # [1, 1]

    D, H = we.shape
    N = wl.shape[1]
    assert x.shape[1] == D

    # Fuse value head as column N of the logits head; pad lane dim to 128 so the
    # output store is a full unmasked vst slab.
    NP = ((N + 1 + 127) // 128) * 128
    w_heads = (jnp.zeros((H, NP), jnp.float32)
               .at[:, :N].set(wl)
               .at[:, N].set(wv[0, :])).astype(jnp.bfloat16)
    b_heads = (jnp.zeros((1, NP), jnp.float32)
               .at[:, :N].set(bl)
               .at[:, N].set(bv[0, 0]))

    # Batch tiling: one padded tile for small B, max_batch_tile-row tiles otherwise.
    if B <= max_batch_tile:
        TB = max(8, ((B + 7) // 8) * 8)
    else:
        TB = max_batch_tile
    n_tiles = pl.cdiv(B, TB)
    Bpad = n_tiles * TB
    if Bpad != B:
        x = jnp.pad(x, ((0, Bpad - B), (0, 0)))

    # Scoped-VMEM budget: double-buffered x tile + output tile + resident weights,
    # with generous headroom for the f32 intermediates / compiler scratch.
    vmem_bytes = (2 * TB * D * 2            # x tiles (bf16, double-buffered)
                  + 2 * TB * NP * 4         # out tiles (f32, double-buffered)
                  + D * H * 2 + H * NP * 2  # resident weights (bf16)
                  + (H + NP) * 4            # resident biases (f32)
                  + 2 * TB * max(H, NP) * 4)  # in-kernel f32 temporaries
    vmem_bytes = min(max(4 * vmem_bytes, 4 << 20), 96 << 20)

    resident = lambda shape: pl.BlockSpec(shape, lambda i: (0, 0))

    heads = pl.pallas_call(
        functools.partial(_policy_kernel, N),
        out_shape=jax.ShapeDtypeStruct((Bpad, NP), jnp.float32),
        grid=(n_tiles,),
        in_specs=[
            pl.BlockSpec((TB, D), lambda i: (i, 0)),   # x tile (pipelined per step)
            resident((D, H)),                          # We      (VMEM-resident)
            resident((1, H)),                          # be      (VMEM-resident)
            resident((H, NP)),                         # W_heads (VMEM-resident)
            resident((1, NP)),                         # b_heads (VMEM-resident)
        ],
        out_specs=pl.BlockSpec((TB, NP), lambda i: (i, 0)),
        compiler_params=pltpu.CompilerParams(
            dimension_semantics=("parallel",),         # megacore sharding on v7x
            vmem_limit_bytes=vmem_bytes),
    )(x, we, be, w_heads, b_heads)

    logits = heads[:B, :N]
    value = heads[:B, N]            # .squeeze(1) on the value branch
    return logits, value


def _normc_init(key, shape, std):
    """normc_initializer: sample normal, normalize columns, scale by std."""
    w = jax.random.normal(key, shape, dtype=jnp.float32)
    w = w * std / jnp.sqrt(jnp.sum(jnp.square(w), axis=0, keepdims=True))
    return w


def init_params(key, d_obs, hidden, num_outputs):
    k_enc, k_log, k_val = jax.random.split(key, 3)
    return {
        # encoder (hidden layers): normc std=1.0 (SlimFC default)
        "we": _normc_init(k_enc, (d_obs, hidden), 1.0),
        "be": jnp.zeros((1, hidden), jnp.float32),
        # logits branch: normc std=0.01
        "wl": _normc_init(k_log, (hidden, num_outputs), 0.01),
        "bl": jnp.zeros((1, num_outputs), jnp.float32),
        # value branch: normc std=0.01, stored as [1, hidden] row vector
        "wv": _normc_init(k_val, (hidden, 1), 0.01).T,
        "bv": jnp.zeros((1, 1), jnp.float32),
    }


if __name__ == "__main__":
    key = jax.random.PRNGKey(0)
    k_obs, k_par = jax.random.split(key)

    B, C, Hs, Ws = 8, 4, 4, 4          # small image-like observation
    hidden = 32                         # out_channels_all from hidden layers
    num_outputs = 16                    # action logits

    obs = jax.random.normal(k_obs, (B, C, Hs, Ws), dtype=jnp.float32)
    params = init_params(k_par, C * Hs * Ws, hidden, num_outputs)

    logits, value = base_policy_forward(obs, params)
    jax.block_until_ready((logits, value))

    # Pure-JAX reference with the same bf16 input/weight rounding (f32 accumulate).
    def _bf(a):
        return a.astype(jnp.bfloat16).astype(jnp.float32)

    x32 = obs.reshape(B, -1)
    h_ref = jnp.maximum(_bf(x32) @ _bf(params["we"]) + params["be"], 0.0)
    hb = _bf(h_ref)
    logits_ref = jnp.tanh(hb @ _bf(params["wl"]) + params["bl"]) * 10.0
    value_ref = (hb @ _bf(params["wv"]).T + params["bv"])[:, 0]

    assert logits.shape == (B, num_outputs) and value.shape == (B,)
    assert jnp.allclose(logits, logits_ref, atol=1e-2, rtol=1e-2)
    assert jnp.allclose(value, value_ref, atol=1e-2, rtol=1e-2)

    print("KERNEL_OK")
</pallas_src>

<mosaic_0001>
module attributes {stable_mosaic.version = 11 : i64} {
  func.func @_policy_kernel(%arg0: i32, %arg1: memref<8x64xbf16, #tpu.memory_space<vmem>>, %arg2: memref<64x32xbf16, #tpu.memory_space<vmem>>, %arg3: memref<1x32xf32, #tpu.memory_space<vmem>>, %arg4: memref<32x128xbf16, #tpu.memory_space<vmem>>, %arg5: memref<1x128xf32, #tpu.memory_space<vmem>>, %arg6: memref<8x128xf32, #tpu.memory_space<vmem>>) attributes {dimension_semantics = [#tpu.dimension_semantics<parallel>], iteration_bounds = array<i64: 1>, scalar_prefetch = 0 : i64, scratch_operands = 0 : i64, tpu.core_type = #tpu.core_type<tc>, window_params = [{transform_indices = @transform_0, window_bounds = array<i64: 8, 64>}, {pipeline_mode = #tpu.pipeline_mode<synchronous>, transform_indices = @transform_1, window_bounds = array<i64: 64, 32>}, {pipeline_mode = #tpu.pipeline_mode<synchronous>, transform_indices = @transform_2, window_bounds = array<i64: 1, 32>}, {pipeline_mode = #tpu.pipeline_mode<synchronous>, transform_indices = @transform_3, window_bounds = array<i64: 32, 128>}, {pipeline_mode = #tpu.pipeline_mode<synchronous>, transform_indices = @transform_4, window_bounds = array<i64: 1, 128>}, {transform_indices = @transform_5, window_bounds = array<i64: 8, 128>}]} {
    %c0 = arith.constant 0 : index
    %c0_0 = arith.constant 0 : index
    %0 = vector.load %arg1[%c0, %c0_0] : memref<8x64xbf16, #tpu.memory_space<vmem>>, vector<8x64xbf16>
    %c0_1 = arith.constant 0 : index
    %c0_2 = arith.constant 0 : index
    %1 = vector.load %arg2[%c0_1, %c0_2] : memref<64x32xbf16, #tpu.memory_space<vmem>>, vector<64x32xbf16>
    %cst = arith.constant dense<0.000000e+00> : vector<8x32xf32>
    %2 = tpu.matmul %0, %1, %cst {dimension_numbers = #tpu.dot_dimension_numbers<[1], [0], [0], [1], [0, 0, 1, 1], [], []>} : vector<8x64xbf16>, vector<64x32xbf16>, vector<8x32xf32> -> vector<8x32xf32>
    %c0_3 = arith.constant 0 : index
    %c0_4 = arith.constant 0 : index
    %3 = vector.load %arg3[%c0_3, %c0_4] : memref<1x32xf32, #tpu.memory_space<vmem>>, vector<1x32xf32>
    %4 = vector.broadcast %3 : vector<1x32xf32> to vector<8x32xf32>
    %5 = arith.addf %2, %4 : vector<8x32xf32>
    %cst_5 = arith.constant 0.000000e+00 : f32
    %6 = vector.broadcast %cst_5 : f32 to vector<8x32xf32>
    %7 = arith.maximumf %5, %6 : vector<8x32xf32>
    %8 = arith.truncf %7 : vector<8x32xf32> to vector<8x32xbf16>
    %c0_6 = arith.constant 0 : index
    %c0_7 = arith.constant 0 : index
    %9 = vector.load %arg4[%c0_6, %c0_7] : memref<32x128xbf16, #tpu.memory_space<vmem>>, vector<32x128xbf16>
    %cst_8 = arith.constant dense<0.000000e+00> : vector<8x128xf32>
    %10 = tpu.matmul %8, %9, %cst_8 {dimension_numbers = #tpu.dot_dimension_numbers<[1], [0], [0], [1], [0, 0, 1, 1], [], []>} : vector<8x32xbf16>, vector<32x128xbf16>, vector<8x128xf32> -> vector<8x128xf32>
    %c0_9 = arith.constant 0 : index
    %c0_10 = arith.constant 0 : index
    %11 = vector.load %arg5[%c0_9, %c0_10] : memref<1x128xf32, #tpu.memory_space<vmem>>, vector<1x128xf32>
    %12 = vector.broadcast %11 : vector<1x128xf32> to vector<8x128xf32>
    %13 = arith.addf %10, %12 : vector<8x128xf32>
    %14 = tpu.iota {dimensions = array<i32: 1>} : vector<8x128xi32>
    %c16_i32 = arith.constant 16 : i32
    %15 = vector.broadcast %c16_i32 : i32 to vector<8x128xi32>
    %16 = arith.cmpi slt, %14, %15 : vector<8x128xi32>
    %17 = math.tanh %13 : vector<8x128xf32>
    %cst_11 = arith.constant 1.000000e+01 : f32
    %18 = vector.broadcast %cst_11 : f32 to vector<8x128xf32>
    %19 = arith.mulf %17, %18 : vector<8x128xf32>
    %20 = arith.select %16, %19, %13 : vector<8x128xi1>, vector<8x128xf32>
    %c0_12 = arith.constant 0 : index
    %c0_13 = arith.constant 0 : index
    %21 = vector.load %arg6[%c0_12, %c0_13] : memref<8x128xf32, #tpu.memory_space<vmem>>, vector<8x128xf32>
    tpu.vector_store %arg6[%c0_12, %c0_13], %20 {strides = array<i32>} : memref<8x128xf32, #tpu.memory_space<vmem>>, vector<8x128xf32>,
    return
  }
  func.func @transform_0(%arg0: i32) -> (i32, i32) {
    %c0_i32 = arith.constant 0 : i32
    %c0_i32_0 = arith.constant 0 : i32
    return %arg0, %c0_i32 : i32, i32
  }
  func.func @transform_1(%arg0: i32) -> (i32, i32) {
    %c0_i32 = arith.constant 0 : i32
    %c0_i32_0 = arith.constant 0 : i32
    %c0_i32_1 = arith.constant 0 : i32
    return %c0_i32, %c0_i32_0 : i32, i32
  }
  func.func @transform_2(%arg0: i32) -> (i32, i32) {
    %c0_i32 = arith.constant 0 : i32
    %c0_i32_0 = arith.constant 0 : i32
    %c0_i32_1 = arith.constant 0 : i32
    return %c0_i32, %c0_i32_0 : i32, i32
  }
  func.func @transform_3(%arg0: i32) -> (i32, i32) {
    %c0_i32 = arith.constant 0 : i32
    %c0_i32_0 = arith.constant 0 : i32
    %c0_i32_1 = arith.constant 0 : i32
    return %c0_i32, %c0_i32_0 : i32, i32
  }
  func.func @transform_4(%arg0: i32) -> (i32, i32) {
    %c0_i32 = arith.constant 0 : i32
    %c0_i32_0 = arith.constant 0 : i32
    %c0_i32_1 = arith.constant 0 : i32
    return %c0_i32, %c0_i32_0 : i32, i32
  }
  func.func @transform_5(%arg0: i32) -> (i32, i32) {
    %c0_i32 = arith.constant 0 : i32
    %c0_i32_0 = arith.constant 0 : i32
    return %arg0, %c0_i32 : i32, i32
  }
}

</mosaic_0001>

<llo_original>
// kernel: tpu_custom_call.1
$region0: #{tpu_custom_call.1}
  #allocation0 [shape = 'u32[]', space=smem, size = 0x4, offset = 0x4, fixed_abs, tag = 'smem constant byte address 0x4 - core index']
  #allocation1 [shape = 'u32[144,128]{1,0:T(1,128)}', space=vmem, size = 0x12000, scoped, tag = 'internal scratch']
  %s0 = inlined_call_operand.vmem [shape: bf16[8,64], index: 0, kind: input, shape index: {}]
  %s1 = inlined_call_operand.vmem [shape: bf16[64,32], index: 1, kind: input, shape index: {}]
  %s2 = inlined_call_operand.vmem [shape: f32[1,32], index: 2, kind: input, shape index: {}]
  %s3 = inlined_call_operand.vmem [shape: bf16[32,128], index: 3, kind: input, shape index: {}]
  %s4 = inlined_call_operand.vmem [shape: f32[1,128], index: 4, kind: input, shape index: {}]
  %s5 = inlined_call_operand.hbm [shape: f32[8,128], index: 5, kind: output, shape index: {}]
  %s6 = sld [smem:[#allocation0]]
  $region30: #{tpu_custom_call.1} parent=0
    _
  %s8 = ssub.s32 1, %s6
  %s9 = scalar_select 0, %s8, %s6
  $region1: #{tpu_custom_call.1} parent=0
    #allocation2 [shape = 'u8[4096]{0}', space=vmem, size = 0x1000, scoped, tag = 'output window, operand 0, single buffered']
    #allocation3 [shape = 's32[1]{0}', space=sflag, size = 0x4, scoped, tag = 'scoped memory for tpu_custom_call.1']
    %10 = vsyncpa [#allocation3], 0
    // Predicated region
    $region2: #{tpu_custom_call.1} parent=1 // pred_check
      _
    $region3: #{tpu_custom_call.1} parent=1 // pred_check_branch
      %12 = sbr.rel (0) target = $region5
    $region4: #{tpu_custom_call.1} parent=1 // pred_region
      _
    $region5: #{tpu_custom_call.1} parent=1 // pred_fallthru
      _
    // Predicated region
    $region6: #{tpu_custom_call.1} parent=1 // pred_check
      _
    $region7: #{tpu_custom_call.1} parent=1 // pred_check_branch
      %14 = sbr.rel (0) target = $region9
    $region8: #{tpu_custom_call.1} parent=1 // pred_region
      _
    $region9: #{tpu_custom_call.1} parent=1 // pred_fallthru
      _
    // Predicated region
    $region10: #{tpu_custom_call.1} parent=1 // pred_check
      _
    $region11: #{tpu_custom_call.1} parent=1 // pred_check_branch
      %16 = sbr.rel (0) target = $region13
    $region12: #{tpu_custom_call.1} parent=1 // pred_region
      _
    $region13: #{tpu_custom_call.1} parent=1 // pred_fallthru
      _
    // Predicated region
    $region14: #{tpu_custom_call.1} parent=1 // pred_check
      _
    $region15: #{tpu_custom_call.1} parent=1 // pred_check_branch
      %18 = sbr.rel (0) target = $region17
    $region16: #{tpu_custom_call.1} parent=1 // pred_region
      _
    $region17: #{tpu_custom_call.1} parent=1 // pred_fallthru
      _
    // Predicated region
    $region18: #{tpu_custom_call.1} parent=1 // pred_check
      _
    $region19: #{tpu_custom_call.1} parent=1 // pred_check_branch
      %20 = sbr.rel (0) target = $region21
    $region20: #{tpu_custom_call.1} parent=1 // pred_region
      _
    $region21: #{tpu_custom_call.1} parent=1 // pred_fallthru
      _
    %v22 = vld [vmem:[%s0] sm:$0xf]
    %v23 = vld [vmem:[%s1] sm:$0xf]
    %v24 = vld [vmem:[%s1 + $0x4] sm:$0xf]
    %v25 = vld [vmem:[%s1 + $0x8] sm:$0xf]
    %v26 = vld [vmem:[%s1 + $0xc] sm:$0xf]
    %v27 = vld [vmem:[%s1 + $0x10] sm:$0xf]
    %v28 = vld [vmem:[%s1 + $0x14] sm:$0xf]
    %v29 = vld [vmem:[%s1 + $0x18] sm:$0xf]
    %v30 = vld [vmem:[%s1 + $0x1c] sm:$0xf]
    %v31 = vld [vmem:[%s2] sm:$0x1]
    %v33 = vlaneseq
    %v34 = vshrl.u32 %v33, 7
    %v35 = vsub.s32 0, %v34
    %v36 = vrot.slane %v31, %v35
    %v46 = vunpack.c.l.b16 %v23
    %v47 = vunpack.c.l.b16 %v24
    %v48 = vunpack.c.l.b16 %v25
    %v49 = vunpack.c.l.b16 %v26
    %v50 = vunpack.c.l.b16 %v27
    %v51 = vunpack.c.l.b16 %v28
    %v52 = vunpack.c.l.b16 %v29
    %v53 = vunpack.c.l.b16 %v30
    %v54 = vpack.c.b16 %v47, %v46
    %v55 = vpack.c.b16 %v49, %v48
    %v56 = vpack.c.b16 %v51, %v50
    %v57 = vpack.c.b16 %v53, %v52
    %vm62 = vcmask 523264
    %v64 = vsel %vm62, %v22, 0
    %66 = vmatprep.subr.bf16.mxu0 0
    %67 = vmatpush1.bf16.msra.mxu0 %v54
    %68 = vmatprep.subr.bf16.mxu0 0
    %69 = vmatpush1.bf16.msra.mxu0 %v55
    %70 = vmatprep.subr.bf16.mxu0 0
    %71 = vmatpush1.bf16.msra.mxu0 %v56
    %72 = vmatprep.subr.bf16.mxu0 0
    %73 = vmatpush1.bf16.msra.mxu0 %v57
    %74 = vmatprep.subr.bf16.mxu0 0
    %75 = vmatpush1.bf16.msra.mxu0 0
    %76 = vmatprep.subr.bf16.mxu0 0
    %77 = vmatpush1.bf16.msra.mxu0 0
    %78 = vmatprep.subr.bf16.mxu0 0
    %79 = vmatpush1.bf16.msra.mxu0 0
    %80 = vmatprep.subr.bf16.mxu0 0
    %81 = vmatpush1.bf16.msra.mxu0 0
    %82 = vmatprep.subr.bf16.mxu0 0
    %83 = vmatpush1.bf16.msra.mxu0 0
    %84 = vmatprep.subr.bf16.mxu0 0
    %85 = vmatpush1.bf16.msra.mxu0 0
    %86 = vmatprep.subr.bf16.mxu0 0
    %87 = vmatpush1.bf16.msra.mxu0 0
    %88 = vmatprep.subr.bf16.mxu0 0
    %89 = vmatpush1.bf16.msra.mxu0 0
    %90 = vmatprep.subr.bf16.mxu0 0
    %91 = vmatpush1.bf16.msra.mxu0 0
    %92 = vmatprep.subr.bf16.mxu0 0
    %93 = vmatpush1.bf16.msra.mxu0 0
    %94 = vmatprep.subr.bf16.mxu0 0
    %95 = vmatpush1.bf16.msra.mxu0 0
    %96 = vmatprep.subr.bf16.mxu0 0
    %97 = vmatpush1.bf16.msra.mxu0 0
    %98 = vmatprep.mubr.bf16.mxu0 0
    %99 = vmatmul.mubr.bf16.gmra.mrb[0].mxu0 %v64
    %v100 = vpop.f32.mrb[0].mxu0
    %v101 = vadd.f32 %v36, %v100
    %v102 = vpop.f32.mrb[0].mxu0
    %v103 = vpop.f32.mrb[0].mxu0
    %v104 = vpop.f32.mrb[0].mxu0
    %105 = vdwg.mxu0
    %v106 = vmax.f32 %v101, 0.0
    %v107 = vpack.c.bf16 %v106, %v106
    %v108 = vld [vmem:[%s3] sm:$0xf]
    %v109 = vld [vmem:[%s3 + $0x4] sm:$0xf]
    %v110 = vld [vmem:[%s3 + $0x8] sm:$0xf]
    %v111 = vld [vmem:[%s3 + $0xc] sm:$0xf]
    %v112 = vld [vmem:[%s4] sm:$0x1]
    %v114 = vlaneseq
    %v115 = vshrl.u32 %v114, 7
    %v116 = vsub.s32 0, %v115
    %v117 = vrot.slane %v112, %v116
    %v123 = vunpack.c.l.b16 %v108
    %v124 = vunpack.c.l.b16 %v109
    %v125 = vunpack.c.l.b16 %v110
    %v126 = vunpack.c.l.b16 %v111
    %v127 = vpack.c.b16 %v124, %v123
    %v128 = vpack.c.b16 %v126, %v125
    %vm131 = vcmask 261120
    %v133 = vsel %vm131, %v107, 0
    %135 = vmatprep.subr.bf16.mxu0 0
    %136 = vmatpush1.bf16.msra.mxu0 %v127
    %137 = vmatprep.subr.bf16.mxu0 0
    %138 = vmatpush1.bf16.msra.mxu0 %v128
    %139 = vmatprep.subr.bf16.mxu0 0
    %140 = vmatpush1.bf16.msra.mxu0 0
    %141 = vmatprep.subr.bf16.mxu0 0
    %142 = vmatpush1.bf16.msra.mxu0 0
    %143 = vmatprep.subr.bf16.mxu0 0
    %144 = vmatpush1.bf16.msra.mxu0 0
    %145 = vmatprep.subr.bf16.mxu0 0
    %146 = vmatpush1.bf16.msra.mxu0 0
    %147 = vmatprep.subr.bf16.mxu0 0
    %148 = vmatpush1.bf16.msra.mxu0 0
    %149 = vmatprep.subr.bf16.mxu0 0
    %150 = vmatpush1.bf16.msra.mxu0 0
    %151 = vmatprep.subr.bf16.mxu0 0
    %152 = vmatpush1.bf16.msra.mxu0 0
    %153 = vmatprep.subr.bf16.mxu0 0
    %154 = vmatpush1.bf16.msra.mxu0 0
    %155 = vmatprep.subr.bf16.mxu0 0
    %156 = vmatpush1.bf16.msra.mxu0 0
    %157 = vmatprep.subr.bf16.mxu0 0
    %158 = vmatpush1.bf16.msra.mxu0 0
    %159 = vmatprep.subr.bf16.mxu0 0
    %160 = vmatpush1.bf16.msra.mxu0 0
    %161 = vmatprep.subr.bf16.mxu0 0
    %162 = vmatpush1.bf16.msra.mxu0 0
    %163 = vmatprep.subr.bf16.mxu0 0
    %164 = vmatpush1.bf16.msra.mxu0 0
    %165 = vmatprep.subr.bf16.mxu0 0
    %166 = vmatpush1.bf16.msra.mxu0 0
    %167 = vmatprep.mubr.bf16.mxu0 0
    %168 = vmatmul.mubr.bf16.gmra.mrb[0].mxu0 %v133
    %v169 = vpop.f32.mrb[0].mxu0
    %v170 = vadd.f32 %v117, %v169
    %v171 = vpop.f32.mrb[0].mxu0
    %v172 = vpop.f32.mrb[0].mxu0
    %v173 = vpop.f32.mrb[0].mxu0
    %174 = vdwg.mxu0
    %v175 = vlaneseq
    %v176 = vand.u32 %v175, 127
    %vm177 = vcmp.lt.s32.totalorder %v176, 16
    %v178 = vtanh.pop %v170
    %v179 = vmul.f32 %v178, 10.0
    %v180 = vsel %vm177, %v179, %v170
    %181 = vst [vmem:[#allocation2] sm:$0xff] %v180
    // Predicated region
    $region22: #{tpu_custom_call.1} parent=1 // pred_check
      _
    $region23: #{tpu_custom_call.1} parent=1 // pred_check_branch
      %183 = sbr.rel (0) target = $region25
    $region24: #{tpu_custom_call.1} parent=1 // pred_region
      %s185 = ssub.s32 128, 128
      %186 = vsyncadd [#allocation3], %s185
      %s188 = sshll.u32 [#allocation2], 4
      %s189 = int_to_ptr.vmem [resolvable:$true] %s188
      %191 = dma.vmem_to_hbm [thread:$0]  %s189, 128, %s5, [#allocation3]
    $region25: #{tpu_custom_call.1} parent=1 // pred_fallthru
      _
    // Predicated region
    $region26: #{tpu_custom_call.1} parent=1 // pred_check
      _
    $region27: #{tpu_custom_call.1} parent=1 // pred_check_branch
      %193 = sbr.rel (0) target = $region29
    $region28: #{tpu_custom_call.1} parent=1 // pred_region
      %194 = dma.done [#allocation3], 128
    $region29: #{tpu_custom_call.1} parent=1 // pred_fallthru
      _
    %195 = vsyncpa [#allocation3], 1

</llo_original>
